<compile_context>
chip_gen: v6e
topology: v6e:2x2x1
jax: 0.10.0
libtpu: 0.0.40
codegen_flags: <defaults>
</compile_context>

<pallas_src>
import functools

import jax
import jax.numpy as jnp
from jax import lax
from jax.experimental import pallas as pl
from jax.experimental.pallas import tpu as pltpu


def _round_up(v, m):
    return ((v + m - 1) // m) * m


def _choose_tiles(n):
    """Query/key tile sizes and padded node count. TK is always a multiple of TQ."""
    if n >= 256:
        tq, tk = 128, 256
    elif n >= 128:
        tq, tk = 128, 128
    else:
        tq = tk = _round_up(n, 8)
    return tq, tk, _round_up(n, tk)


def _compiler_params(dims):
    # Explicit VMEM budget: comfortably under v7x's 64 MiB physical / 32 MiB scoped default,
    # while raising the smaller v5e scoped default. Per-step residency here is < 2 MiB anyway.
    return pltpu.CompilerParams(dimension_semantics=dims,
                                vmem_limit_bytes=48 * 1024 * 1024)


# --------------------------- Kernel A: linear + hardtanh + projections ---------------------------
def _linear_kernel(x_ref, wt_ref, a1_ref, a2_ref, out_ref, s_ref, t_ref):
    out = jnp.dot(x_ref[...], wt_ref[...], preferred_element_type=jnp.float32)
    out = jnp.clip(out, -1.0, 1.0)                       # nn.Hardtanh() default (-1, 1)
    out_ref[...] = out
    # Attention projections on VPU + lane reduction (avoids lane-sparse width-1 MXU matmuls).
    s_ref[...] = jnp.sum(out * a1_ref[...], axis=-1, keepdims=True)
    t_ref[...] = jnp.sum(out * a2_ref[...], axis=-1, keepdims=True)


# --------------------------- Kernel B: online softmax stats (m, l) -------------------------------
def _softmax_stats_kernel(s_ref, t_ref, m_ref, l_ref, m_sc, l_sc, *, n_valid, tk):
    kb = pl.program_id(1)

    @pl.when(kb == 0)
    def _():
        m_sc[...] = jnp.full_like(m_sc, -jnp.inf)
        l_sc[...] = jnp.zeros_like(l_sc)

    att = s_ref[...] + t_ref[...]                         # (TQ,1)+(1,TK) -> (TQ,TK)
    if n_valid is not None:                               # mask zero-padded key columns
        col = kb * tk + lax.broadcasted_iota(jnp.int32, att.shape, 1)
        att = jnp.where(col < n_valid, att, -jnp.inf)

    m_prev = m_sc[...]
    m_new = jnp.maximum(m_prev, jnp.max(att, axis=-1, keepdims=True))
    l_sc[...] = l_sc[...] * jnp.exp(m_prev - m_new) + \
        jnp.sum(jnp.exp(att - m_new), axis=-1, keepdims=True)
    m_sc[...] = m_new

    @pl.when(kb == pl.num_programs(1) - 1)
    def _():
        m_ref[...] = m_sc[...]
        l_ref[...] = l_sc[...]


# --------------------------- Kernel C: stream p tiles + aggregate y ------------------------------
def _attend_kernel(s_ref, t_ref, m_ref, l_ref, outk_ref, p_ref, y_ref, acc_sc, *, n_valid, tk):
    kb = pl.program_id(1)

    @pl.when(kb == 0)
    def _():
        acc_sc[...] = jnp.zeros_like(acc_sc)

    att = s_ref[...] + t_ref[...]                         # (TQ,TK)
    inv_l = pl.reciprocal(l_ref[...], approx=True)        # EUP vrcp, effectively free
    p = jnp.exp(att - m_ref[...]) * inv_l
    if n_valid is not None:                               # zero out padded key columns
        col = kb * tk + lax.broadcasted_iota(jnp.int32, p.shape, 1)
        p = jnp.where(col < n_valid, p, 0.0)
    p_ref[...] = p                                        # lane-dense (TQ,TK) stream-out

    acc_sc[...] += jnp.dot(p, outk_ref[...], preferred_element_type=jnp.float32)

    @pl.when(kb == pl.num_programs(1) - 1)
    def _():
        y_ref[...] = acc_sc[...]


# ------------------------------------------ Wrapper ----------------------------------------------
def graph_attention_layer_forward(x, weight, a):
    """x: (N, in_dim) f32; weight: (out_dim, in_dim); a: (2*out_dim,).

    Returns (y, neighbor_indices, attentions), mirroring the PyTorch module.
    """
    x = x.astype(jnp.float32)
    n, in_dim = x.shape
    out_dim = weight.shape[0]

    dp = _round_up(out_dim, 128)                          # lane-dense feature dim
    tq, tk, n_pad = _choose_tiles(n)
    nq, nk = n_pad // tq, n_pad // tk
    n_valid = n if n_pad > n else None                    # compile-time mask switch

    # Zero-padded, lane-dense inputs / parameters.
    x_p = jnp.zeros((n_pad, in_dim), jnp.float32).at[:n].set(x)
    wt_p = jnp.zeros((in_dim, dp), jnp.float32).at[:, :out_dim].set(weight.T.astype(jnp.float32))
    a1 = jnp.zeros((1, dp), jnp.float32).at[0, :out_dim].set(a[:out_dim].astype(jnp.float32))
    a2 = jnp.zeros((1, dp), jnp.float32).at[0, :out_dim].set(a[out_dim:].astype(jnp.float32))

    # Kernel A: out = hardtanh(x @ W^T), s = out.a1, t = out.a2 (computed once, reused below).
    out_p, s_col, t_col = pl.pallas_call(
        _linear_kernel,
        out_shape=(jax.ShapeDtypeStruct((n_pad, dp), jnp.float32),
                   jax.ShapeDtypeStruct((n_pad, 1), jnp.float32),
                   jax.ShapeDtypeStruct((n_pad, 1), jnp.float32)),
        grid=(nq,),
        in_specs=[pl.BlockSpec((tq, in_dim), lambda i: (i, 0)),
                  pl.BlockSpec((in_dim, dp), lambda i: (0, 0)),
                  pl.BlockSpec((1, dp), lambda i: (0, 0)),
                  pl.BlockSpec((1, dp), lambda i: (0, 0))],
        out_specs=(pl.BlockSpec((tq, dp), lambda i: (i, 0)),
                   pl.BlockSpec((tq, 1), lambda i: (i, 0)),
                   pl.BlockSpec((tq, 1), lambda i: (i, 0))),
        compiler_params=_compiler_params(("parallel",)),
    )(x_p, wt_p, a1, a2)

    t_row = t_col.reshape(1, n_pad)                       # lane-major row for key-tile broadcast

    # Kernel B: flash-style online softmax statistics.
    m_col, l_col = pl.pallas_call(
        functools.partial(_softmax_stats_kernel, n_valid=n_valid, tk=tk),
        out_shape=(jax.ShapeDtypeStruct((n_pad, 1), jnp.float32),
                   jax.ShapeDtypeStruct((n_pad, 1), jnp.float32)),
        grid=(nq, nk),
        in_specs=[pl.BlockSpec((tq, 1), lambda i, k: (i, 0)),
                  pl.BlockSpec((1, tk), lambda i, k: (0, k))],
        out_specs=(pl.BlockSpec((tq, 1), lambda i, k: (i, 0)),
                   pl.BlockSpec((tq, 1), lambda i, k: (i, 0))),
        scratch_shapes=[pltpu.VMEM((tq, 1), jnp.float32),
                        pltpu.VMEM((tq, 1), jnp.float32)],
        compiler_params=_compiler_params(("parallel", "arbitrary")),
    )(s_col, t_row)

    # Kernel C: stream normalized p tiles (written once) and accumulate y = p @ out.
    p_pad, y_pad = pl.pallas_call(
        functools.partial(_attend_kernel, n_valid=n_valid, tk=tk),
        out_shape=(jax.ShapeDtypeStruct((n_pad, n_pad), jnp.float32),
                   jax.ShapeDtypeStruct((n_pad, dp), jnp.float32)),
        grid=(nq, nk),
        in_specs=[pl.BlockSpec((tq, 1), lambda i, k: (i, 0)),
                  pl.BlockSpec((1, tk), lambda i, k: (0, k)),
                  pl.BlockSpec((tq, 1), lambda i, k: (i, 0)),
                  pl.BlockSpec((tq, 1), lambda i, k: (i, 0)),
                  pl.BlockSpec((tk, dp), lambda i, k: (k, 0))],
        out_specs=(pl.BlockSpec((tq, tk), lambda i, k: (i, k)),
                   pl.BlockSpec((tq, dp), lambda i, k: (i, 0))),
        scratch_shapes=[pltpu.VMEM((tq, dp), jnp.float32)],
        compiler_params=_compiler_params(("parallel", "arbitrary")),
    )(s_col, t_row, m_col, l_col, out_p)

    y = y_pad[:n, :out_dim]
    p = p_pad[:n, :n]

    # --- glue: k-NN graph (Gram trick: d^2 = |x|^2 + |x|^2^T - 2 x x^T; sqrt dropped, monotone) ---
    sq = jnp.sum(x * x, axis=-1)
    d2 = jnp.maximum(sq[:, None] + sq[None, :] - 2.0 * (x @ x.T), 0.0)
    # TODO(synk): torch .sort() tie-breaking is not guaranteed stable; jnp.argsort is stable and
    # the Gram-form distance may reorder exact/near ties.
    graph = jnp.argsort(d2, axis=-1).astype(jnp.int32)
    # TODO(synk): the graph-order gather could be fused into kernel C with scalar-prefetched graph
    # indices; kept as a single XLA take_along_axis pass here.
    attentions = jnp.take_along_axis(p, graph, axis=1)
    return y, graph, attentions


def _reference(x, weight, a):
    """Pure-JAX reference of the same forward (sanity check)."""
    out_dim = weight.shape[0]
    out = jnp.clip(x @ weight.T, -1.0, 1.0)
    s = out @ a[:out_dim]
    t = out @ a[out_dim:]
    att = s[:, None] + t[None, :]
    p = jax.nn.softmax(att, axis=-1)
    y = p @ out
    diff = x[:, None, :] - x[None, :, :]
    dist = jnp.sqrt(jnp.sum(diff * diff, axis=-1))
    graph = jnp.argsort(dist, axis=-1).astype(jnp.int32)
    return y, graph, jnp.take_along_axis(p, graph, axis=1)


if __name__ == "__main__":
    # Small shapes consistent with the module: N nodes, in_dim -> out_dim.
    N, in_dim, out_dim = 8, 16, 16

    key = jax.random.PRNGKey(0)
    kx, kw, ka = jax.random.split(key, 3)

    x = jax.random.normal(kx, (N, in_dim), dtype=jnp.float32)

    # Deterministic parameter init matching the module's __init__:
    #   weight ~ U(-1/sqrt(in_dim), 1/sqrt(in_dim)),  a ~ U(0, 1) of size 2*out_dim.
    std = 1.0 / jnp.sqrt(jnp.float32(in_dim))
    weight = jax.random.uniform(kw, (out_dim, in_dim), jnp.float32, -std, std)
    a = jax.random.uniform(ka, (2 * out_dim,), jnp.float32, 0.0, 1.0)

    y, nbr_idx, attn = graph_attention_layer_forward(x, weight, a)
    jax.block_until_ready((y, nbr_idx, attn))

    y_ref, nbr_ref, attn_ref = _reference(x, weight, a)
    assert y.shape == (N, out_dim) and nbr_idx.shape == (N, N) and attn.shape == (N, N)
    # Tolerance loosened vs 1e-5 because pl.reciprocal(approx=True) is used for the softmax denom.
    assert jnp.allclose(y, y_ref, rtol=2e-3, atol=2e-3)
    assert jnp.array_equal(nbr_idx, nbr_ref)
    assert jnp.allclose(attn, attn_ref, rtol=2e-3, atol=2e-3)

    print("KERNEL_OK")
</pallas_src>

<mosaic_0001>
module attributes {stable_mosaic.version = 11 : i64} {
  func.func @_linear_kernel(%arg0: i32, %arg1: memref<8x16xf32, #tpu.memory_space<vmem>>, %arg2: memref<16x128xf32, #tpu.memory_space<vmem>>, %arg3: memref<1x128xf32, #tpu.memory_space<vmem>>, %arg4: memref<1x128xf32, #tpu.memory_space<vmem>>, %arg5: memref<8x128xf32, #tpu.memory_space<vmem>>, %arg6: memref<8x1xf32, #tpu.memory_space<vmem>>, %arg7: memref<8x1xf32, #tpu.memory_space<vmem>>) attributes {dimension_semantics = [#tpu.dimension_semantics<parallel>], iteration_bounds = array<i64: 1>, scalar_prefetch = 0 : i64, scratch_operands = 0 : i64, tpu.core_type = #tpu.core_type<tc>, window_params = [{transform_indices = @transform_0, window_bounds = array<i64: 8, 16>}, {pipeline_mode = #tpu.pipeline_mode<synchronous>, transform_indices = @transform_1, window_bounds = array<i64: 16, 128>}, {pipeline_mode = #tpu.pipeline_mode<synchronous>, transform_indices = @transform_2, window_bounds = array<i64: 1, 128>}, {pipeline_mode = #tpu.pipeline_mode<synchronous>, transform_indices = @transform_3, window_bounds = array<i64: 1, 128>}, {transform_indices = @transform_4, window_bounds = array<i64: 8, 128>}, {transform_indices = @transform_5, window_bounds = array<i64: 8, 1>}, {transform_indices = @transform_6, window_bounds = array<i64: 8, 1>}]} {
    %c0 = arith.constant 0 : index
    %c0_0 = arith.constant 0 : index
    %0 = vector.load %arg1[%c0, %c0_0] : memref<8x16xf32, #tpu.memory_space<vmem>>, vector<8x16xf32>
    %c0_1 = arith.constant 0 : index
    %c0_2 = arith.constant 0 : index
    %1 = vector.load %arg2[%c0_1, %c0_2] : memref<16x128xf32, #tpu.memory_space<vmem>>, vector<16x128xf32>
    %cst = arith.constant dense<0.000000e+00> : vector<8x128xf32>
    %2 = tpu.matmul %0, %1, %cst {dimension_numbers = #tpu.dot_dimension_numbers<[1], [0], [0], [1], [0, 0, 1, 1], [], []>} : vector<8x16xf32>, vector<16x128xf32>, vector<8x128xf32> -> vector<8x128xf32>
    %cst_3 = arith.constant -1.000000e+00 : f32
    %cst_4 = arith.constant 1.000000e+00 : f32
    %3 = vector.broadcast %cst_3 : f32 to vector<8x128xf32>
    %4 = arith.maximumf %3, %2 : vector<8x128xf32>
    %5 = vector.broadcast %cst_4 : f32 to vector<8x128xf32>
    %6 = arith.minimumf %5, %4 : vector<8x128xf32>
    %c0_5 = arith.constant 0 : index
    %c0_6 = arith.constant 0 : index
    %7 = vector.load %arg5[%c0_5, %c0_6] : memref<8x128xf32, #tpu.memory_space<vmem>>, vector<8x128xf32>
    tpu.vector_store %arg5[%c0_5, %c0_6], %6 {strides = array<i32>} : memref<8x128xf32, #tpu.memory_space<vmem>>, vector<8x128xf32>,
    %c0_7 = arith.constant 0 : index
    %c0_8 = arith.constant 0 : index
    %8 = vector.load %arg3[%c0_7, %c0_8] : memref<1x128xf32, #tpu.memory_space<vmem>>, vector<1x128xf32>
    %9 = vector.broadcast %8 : vector<1x128xf32> to vector<8x128xf32>
    %10 = arith.mulf %6, %9 : vector<8x128xf32>
    %cst_9 = arith.constant dense<0.000000e+00> : vector<8xf32>
    %11 = vector.multi_reduction <add>, %10, %cst_9 [1] : vector<8x128xf32> to vector<8xf32>
    %12 = vector.shape_cast %11 : vector<8xf32> to vector<8x1xf32>
    %c0_10 = arith.constant 0 : index
    %c0_11 = arith.constant 0 : index
    %13 = vector.load %arg6[%c0_10, %c0_11] : memref<8x1xf32, #tpu.memory_space<vmem>>, vector<8x1xf32>
    tpu.vector_store %arg6[%c0_10, %c0_11], %12 {strides = array<i32>} : memref<8x1xf32, #tpu.memory_space<vmem>>, vector<8x1xf32>,
    %c0_12 = arith.constant 0 : index
    %c0_13 = arith.constant 0 : index
    %14 = vector.load %arg4[%c0_12, %c0_13] : memref<1x128xf32, #tpu.memory_space<vmem>>, vector<1x128xf32>
    %15 = vector.broadcast %14 : vector<1x128xf32> to vector<8x128xf32>
    %16 = arith.mulf %6, %15 : vector<8x128xf32>
    %cst_14 = arith.constant dense<0.000000e+00> : vector<8xf32>
    %17 = vector.multi_reduction <add>, %16, %cst_14 [1] : vector<8x128xf32> to vector<8xf32>
    %18 = vector.shape_cast %17 : vector<8xf32> to vector<8x1xf32>
    %c0_15 = arith.constant 0 : index
    %c0_16 = arith.constant 0 : index
    %19 = vector.load %arg7[%c0_15, %c0_16] : memref<8x1xf32, #tpu.memory_space<vmem>>, vector<8x1xf32>
    tpu.vector_store %arg7[%c0_15, %c0_16], %18 {strides = array<i32>} : memref<8x1xf32, #tpu.memory_space<vmem>>, vector<8x1xf32>,
    return
  }
  func.func @transform_0(%arg0: i32) -> (i32, i32) {
    %c0_i32 = arith.constant 0 : i32
    %c0_i32_0 = arith.constant 0 : i32
    return %arg0, %c0_i32 : i32, i32
  }
  func.func @transform_1(%arg0: i32) -> (i32, i32) {
    %c0_i32 = arith.constant 0 : i32
    %c0_i32_0 = arith.constant 0 : i32
    %c0_i32_1 = arith.constant 0 : i32
    return %c0_i32, %c0_i32_0 : i32, i32
  }
  func.func @transform_2(%arg0: i32) -> (i32, i32) {
    %c0_i32 = arith.constant 0 : i32
    %c0_i32_0 = arith.constant 0 : i32
    %c0_i32_1 = arith.constant 0 : i32
    return %c0_i32, %c0_i32_0 : i32, i32
  }
  func.func @transform_3(%arg0: i32) -> (i32, i32) {
    %c0_i32 = arith.constant 0 : i32
    %c0_i32_0 = arith.constant 0 : i32
    %c0_i32_1 = arith.constant 0 : i32
    return %c0_i32, %c0_i32_0 : i32, i32
  }
  func.func @transform_4(%arg0: i32) -> (i32, i32) {
    %c0_i32 = arith.constant 0 : i32
    %c0_i32_0 = arith.constant 0 : i32
    return %arg0, %c0_i32 : i32, i32
  }
  func.func @transform_5(%arg0: i32) -> (i32, i32) {
    %c0_i32 = arith.constant 0 : i32
    %c0_i32_0 = arith.constant 0 : i32
    return %arg0, %c0_i32 : i32, i32
  }
  func.func @transform_6(%arg0: i32) -> (i32, i32) {
    %c0_i32 = arith.constant 0 : i32
    %c0_i32_0 = arith.constant 0 : i32
    return %arg0, %c0_i32 : i32, i32
  }
}

</mosaic_0001>

<llo_original>
// kernel: tpu_custom_call.1
$region0: #{tpu_custom_call.1}
  #allocation0 [shape = 'u32[]', space=smem, size = 0x4, offset = 0x4, fixed_abs, tag = 'smem constant byte address 0x4 - core index']
  #allocation1 [shape = 'u32[144,128]{1,0:T(1,128)}', space=vmem, size = 0x12000, scoped, tag = 'internal scratch']
  %s0 = inlined_call_operand.hbm [shape: f32[8,16], index: 0, kind: input, shape index: {}]
  %s1 = inlined_call_operand.hbm [shape: f32[16,128], index: 1, kind: input, shape index: {}]
  %s2 = inlined_call_operand.vmem [shape: f32[1,128], index: 2, kind: input, shape index: {}]
  %s3 = inlined_call_operand.vmem [shape: f32[1,128], index: 3, kind: input, shape index: {}]
  %s4 = inlined_call_operand.hbm [shape: f32[8,128], index: 4, kind: output, shape index: {0}]
  %s5 = inlined_call_operand.vmem [shape: f32[8,1], index: 5, kind: output, shape index: {1}]
  %s6 = inlined_call_operand.vmem [shape: f32[8,1], index: 6, kind: output, shape index: {2}]
  %7 = xla_tuple %s4, %s5, %s6
  %s8 = sld [smem:[#allocation0]]
  $region50: #{tpu_custom_call.1} parent=0
    _
  %s10 = ssub.s32 1, %s8
  %s11 = scalar_select 0, %s10, %s8
  $region1: #{tpu_custom_call.1} parent=0
    #allocation2 [shape = 'u8[4096]{0}', space=vmem, size = 0x1000, scoped, tag = 'input window, operand 0, single buffered']
    #allocation3 [shape = 's32[1]{0}', space=sflag, size = 0x4, scoped, tag = 'scoped memory for tpu_custom_call.1']
    #allocation4 [shape = 's32[1]{0}', space=sflag, size = 0x4, scoped, tag = 'scoped memory for tpu_custom_call.1']
    #allocation5 [shape = 'u8[8192]{0}', space=vmem, size = 0x2000, scoped, tag = 'input window, operand 1, single buffered']
    #allocation6 [shape = 's32[1]{0}', space=sflag, size = 0x4, scoped, tag = 'scoped memory for tpu_custom_call.1']
    #allocation7 [shape = 'u8[4096]{0}', space=vmem, size = 0x1000, scoped, tag = 'output window, operand 0, single buffered']
    %12 = vsyncpa [#allocation3], 0
    %13 = vsyncpa [#allocation6], 0
    %14 = vsyncpa [#allocation4], 0
    // Predicated region
    $region2: #{tpu_custom_call.1} parent=1 // pred_check
      _
    $region3: #{tpu_custom_call.1} parent=1 // pred_check_branch
      %16 = sbr.rel (0) target = $region5
    $region4: #{tpu_custom_call.1} parent=1 // pred_region
      %s18 = ssub.s32 128, 128
      %19 = vsyncadd [#allocation3], %s18
      %s21 = sshll.u32 [#allocation2], 4
      %s22 = int_to_ptr.vmem [resolvable:$true] %s21
      %24 = dma.hbm_to_vmem [thread:$0]  %s0, 128, %s22, [#allocation3]
    $region5: #{tpu_custom_call.1} parent=1 // pred_fallthru
      _
    // Predicated region
    $region6: #{tpu_custom_call.1} parent=1 // pred_check
      _
    $region7: #{tpu_custom_call.1} parent=1 // pred_check_branch
      %26 = sbr.rel (0) target = $region9
    $region8: #{tpu_custom_call.1} parent=1 // pred_region
      %s28 = ssub.s32 256, 256
      %29 = vsyncadd [#allocation6], %s28
      %s30 = sshll.u32 [#allocation5], 4
      %s31 = int_to_ptr.vmem [resolvable:$true] %s30
      %36 = dma.hbm_to_vmem [thread:$0]  %s1, 256, %s31, [#allocation6], 128, 128, 8
    $region9: #{tpu_custom_call.1} parent=1 // pred_fallthru
      _
    // Predicated region
    $region10: #{tpu_custom_call.1} parent=1 // pred_check
      _
    $region11: #{tpu_custom_call.1} parent=1 // pred_check_branch
      %38 = sbr.rel (0) target = $region13
    $region12: #{tpu_custom_call.1} parent=1 // pred_region
      _
    $region13: #{tpu_custom_call.1} parent=1 // pred_fallthru
      _
    // Predicated region
    $region14: #{tpu_custom_call.1} parent=1 // pred_check
      _
    $region15: #{tpu_custom_call.1} parent=1 // pred_check_branch
      %40 = sbr.rel (0) target = $region17
    $region16: #{tpu_custom_call.1} parent=1 // pred_region
      _
    $region17: #{tpu_custom_call.1} parent=1 // pred_fallthru
      _
    // Predicated region
    $region18: #{tpu_custom_call.1} parent=1 // pred_check
      _
    $region19: #{tpu_custom_call.1} parent=1 // pred_check_branch
      %42 = sbr.rel (0) target = $region21
    $region20: #{tpu_custom_call.1} parent=1 // pred_region
      %43 = dma.done [#allocation3], 128
    $region21: #{tpu_custom_call.1} parent=1 // pred_fallthru
      _
    // Predicated region
    $region22: #{tpu_custom_call.1} parent=1 // pred_check
      _
    $region23: #{tpu_custom_call.1} parent=1 // pred_check_branch
      %45 = sbr.rel (0) target = $region25
    $region24: #{tpu_custom_call.1} parent=1 // pred_region
      %46 = dma.done [#allocation6], 256
    $region25: #{tpu_custom_call.1} parent=1 // pred_fallthru
      _
    %v47 = vld [vmem:[#allocation2] sm:$0xff]
    %v48 = vld [vmem:[#allocation5] sm:$0xff]
    %v49 = vld [vmem:[#allocation5 + $0x8] sm:$0xff]
    %vm50 = vcmask 130048
    %v52 = vsel %vm50, %v47, 0
    %54 = vmatprep.subr.mxu0 0.0
    %55 = vmatpush1.msra.mxu0 0.0
    %56 = vmatprep.subr.mxu0 0.0
    %57 = vmatpush1.msra.mxu0 0.0
    %58 = vmatprep.subr.mxu0 0.0
    %59 = vmatpush1.msra.mxu0 0.0
    %60 = vmatprep.subr.mxu0 0.0
    %61 = vmatpush1.msra.mxu0 0.0
    %62 = vmatprep.subr.mxu0 0.0
    %63 = vmatpush1.msra.mxu0 0.0
    %64 = vmatprep.subr.mxu0 0.0
    %65 = vmatpush1.msra.mxu0 0.0
    %66 = vmatprep.subr.mxu0 0.0
    %67 = vmatpush1.msra.mxu0 0.0
    %68 = vmatprep.subr.mxu0 0.0
    %69 = vmatpush1.msra.mxu0 0.0
    %70 = vmatprep.subr.mxu0 0.0
    %71 = vmatpush1.msra.mxu0 0.0
    %72 = vmatprep.subr.mxu0 0.0
    %73 = vmatpush1.msra.mxu0 0.0
    %74 = vmatprep.subr.mxu0 0.0
    %75 = vmatpush1.msra.mxu0 0.0
    %76 = vmatprep.subr.mxu0 0.0
    %77 = vmatpush1.msra.mxu0 0.0
    %78 = vmatprep.subr.mxu0 0.0
    %79 = vmatpush1.msra.mxu0 0.0
    %80 = vmatprep.subr.mxu0 0.0
    %81 = vmatpush1.msra.mxu0 0.0
    %82 = vmatprep.subr.mxu0 0.0
    %83 = vmatpush1.msra.mxu0 %v49
    %84 = vmatprep.subr.mxu0 0.0
    %85 = vmatpush1.msra.mxu0 %v48
    %86 = vmatprep.subr.mxu0 0.0
    %87 = vmatpush2.msra.mxu0 0.0
    %88 = vmatprep.subr.mxu0 0.0
    %89 = vmatpush2.msra.mxu0 0.0
    %90 = vmatprep.subr.mxu0 0.0
    %91 = vmatpush2.msra.mxu0 0.0
    %92 = vmatprep.subr.mxu0 0.0
    %93 = vmatpush2.msra.mxu0 0.0
    %94 = vmatprep.subr.mxu0 0.0
    %95 = vmatpush2.msra.mxu0 0.0
    %96 = vmatprep.subr.mxu0 0.0
    %97 = vmatpush2.msra.mxu0 0.0
    %98 = vmatprep.subr.mxu0 0.0
    %99 = vmatpush2.msra.mxu0 0.0
    %100 = vmatprep.subr.mxu0 0.0
    %101 = vmatpush2.msra.mxu0 0.0
    %102 = vmatprep.subr.mxu0 0.0
    %103 = vmatpush2.msra.mxu0 0.0
    %104 = vmatprep.subr.mxu0 0.0
    %105 = vmatpush2.msra.mxu0 0.0
    %106 = vmatprep.subr.mxu0 0.0
    %107 = vmatpush2.msra.mxu0 0.0
    %108 = vmatprep.subr.mxu0 0.0
    %109 = vmatpush2.msra.mxu0 0.0
    %110 = vmatprep.subr.mxu0 0.0
    %111 = vmatpush2.msra.mxu0 0.0
    %112 = vmatprep.subr.mxu0 0.0
    %113 = vmatpush2.msra.mxu0 0.0
    %114 = vmatprep.subr.mxu0 0.0
    %115 = vmatpush2.msra.mxu0 0.0
    %116 = vmatprep.subr.mxu0 0.0
    %117 = vmatpush2.msra.mxu0 0.0
    %118 = vmatprep.mubr.f32.mxu0 0.0
    %119 = vmatmul.mubr.f32.gmra.mxu0 %v52
    %v120 = vpop.f32.mrf.mxu0
    %v121 = vadd.f32 0.0, %v120
    %v122 = vpop.f32.mrf.mxu0
    %123 = vdwg.mxu0
    %v124 = vmax.f32 %v121, -1.0
    %v125 = vmin.f32 %v124, 1.0
    %126 = vst [vmem:[#allocation7] sm:$0xff] %v125
    %v127 = vld [vmem:[%s2] sm:$0x1]
    %v129 = vlaneseq
    %v130 = vshrl.u32 %v129, 7
    %v131 = vsub.s32 0, %v130
    %v132 = vrot.slane %v127, %v131
    %v134 = vmul.f32 %v125, %v132
    %135 = vadd.xlane.f32.xlu0 %v134
    %v136 = vpop.xlane.xlu0 %135
    %vm137 = vcmask 7168
    %138 = vst.msk [vmem:[%s5] sm:$0xff] %vm137, %v136
    %v139 = vld [vmem:[%s3] sm:$0x1]
    %v141 = vlaneseq
    %v142 = vshrl.u32 %v141, 7
    %v143 = vsub.s32 0, %v142
    %v144 = vrot.slane %v139, %v143
    %v146 = vmul.f32 %v125, %v144
    %147 = vadd.xlane.f32.xlu0 %v146
    %v148 = vpop.xlane.xlu0 %147
    %149 = vst.msk [vmem:[%s6] sm:$0xff] %vm137, %v148
    // Predicated region
    $region26: #{tpu_custom_call.1} parent=1 // pred_check
      _
    $region27: #{tpu_custom_call.1} parent=1 // pred_check_branch
      %151 = sbr.rel (0) target = $region29
    $region28: #{tpu_custom_call.1} parent=1 // pred_region
      %s153 = ssub.s32 128, 128
      %154 = vsyncadd [#allocation4], %s153
      %s156 = sshll.u32 [#allocation7], 4
      %s157 = int_to_ptr.vmem [resolvable:$true] %s156
      %159 = dma.vmem_to_hbm [thread:$0]  %s157, 128, %s4, [#allocation4]
    $region29: #{tpu_custom_call.1} parent=1 // pred_fallthru
      _
    // Predicated region
    $region30: #{tpu_custom_call.1} parent=1 // pred_check
      _
    $region31: #{tpu_custom_call.1} parent=1 // pred_check_branch
      %161 = sbr.rel (0) target = $region33
    $region32: #{tpu_custom_call.1} parent=1 // pred_region
      _
    $region33: #{tpu_custom_call.1} parent=1 // pred_fallthru
      _
    // Predicated region
    $region34: #{tpu_custom_call.1} parent=1 // pred_check
      _
    $region35: #{tpu_custom_call.1} parent=1 // pred_check_branch
      %163 = sbr.rel (0) target = $region37
    $region36: #{tpu_custom_call.1} parent=1 // pred_region
      _
    $region37: #{tpu_custom_call.1} parent=1 // pred_fallthru
      _
    // Predicated region
    $region38: #{tpu_custom_call.1} parent=1 // pred_check
      _
    $region39: #{tpu_custom_call.1} parent=1 // pred_check_branch
      %165 = sbr.rel (0) target = $region41
    $region40: #{tpu_custom_call.1} parent=1 // pred_region
      %166 = dma.done [#allocation4], 128
    $region41: #{tpu_custom_call.1} parent=1 // pred_fallthru
      _
    // Predicated region
    $region42: #{tpu_custom_call.1} parent=1 // pred_check
      _
    $region43: #{tpu_custom_call.1} parent=1 // pred_check_branch
      %168 = sbr.rel (0) target = $region45
    $region44: #{tpu_custom_call.1} parent=1 // pred_region
      _
    $region45: #{tpu_custom_call.1} parent=1 // pred_fallthru
      _
    // Predicated region
    $region46: #{tpu_custom_call.1} parent=1 // pred_check
      _
    $region47: #{tpu_custom_call.1} parent=1 // pred_check_branch
      %170 = sbr.rel (0) target = $region49
    $region48: #{tpu_custom_call.1} parent=1 // pred_region
      _
    $region49: #{tpu_custom_call.1} parent=1 // pred_fallthru
      _
    %171 = vsyncpa [#allocation3], 1
    %172 = vsyncpa [#allocation6], 1
    %173 = vsyncpa [#allocation4], 1

</llo_original>
